<compile_context>
chip_gen: v7x
topology: tpu7x:2x2x1
jax: 0.10.0
libtpu: 0.0.40
codegen_flags: <defaults>
</compile_context>

<pallas_src>
import functools
import math

import jax
import jax.numpy as jnp
from jax import lax
from jax.experimental import pallas as pl
from jax.experimental.pallas import tpu as pltpu


def _detect_kernel(x_ref, w_ref, c_ref, *out_refs, nx, chunk, with_raw):
    """One (batch, hw-tile) block of the detection head.

    x_ref : (1, cin, t_hw)     NCHW activation block, spatial on lanes
    w_ref : (na*no, cin)       fused 1x1-conv weight (all anchors), matmul dtype
    c_ref : (na*no, 5)         per output-channel decode constants
                               [bias, alpha, beta, stride*mask_x, stride*mask_y]
    outs  : raw (1, na*no, t_hw)  pre-sigmoid conv output (optional, channel-major)
            dec (1, na*no, t_hw)  decoded boxes / conf / cls   (channel-major)
    """
    if with_raw:
        raw_ref, dec_ref = out_refs
    else:
        (dec_ref,) = out_refs

    t_hw = x_ref.shape[2]
    n_chunks = t_hw // chunk
    inv_nx = 1.0 / float(nx)
    tile_base = pl.program_id(1) * t_hw

    def do_chunk(c0):
        # tiny per-row (output-channel) constants; kept in the body so their
        # live range stays inside one loop iteration (no cross-iter vregs)
        bias = c_ref[:, 0:1]          # conv bias
        alpha = c_ref[:, 1:2]         # s^2 coeff: 4*anchor on wh rows, else 0
        beta = c_ref[:, 2:3]          # s   coeff: 2*stride on xy, 1 on conf/cls
        mx = c_ref[:, 3:4]            # stride on the x row of each anchor, else 0
        my = c_ref[:, 4:5]            # stride on the y row of each anchor, else 0

        x = x_ref[0, :, pl.ds(c0, chunk)]                        # (cin, chunk)
        # fused 1x1 conv over all anchors: (na*no, cin) @ (cin, chunk) on the MXU
        acc = lax.dot_general(w_ref[...], x.astype(w_ref.dtype),
                              (((1,), (0,)), ((), ())),
                              preferred_element_type=jnp.float32)
        acc = acc + bias                                         # (na*no, chunk)
        if with_raw:
            raw_ref[0, :, pl.ds(c0, chunk)] = acc.astype(raw_ref.dtype)

        s = jax.nn.sigmoid(acc)

        # pixel coordinates of this chunk's columns (lane axis); float div/mod
        # by nx is exact for any realistic feature map (hw << 2^23)
        p = (tile_base + c0
             + lax.broadcasted_iota(jnp.int32, (1, chunk), 1)).astype(jnp.float32)
        gy = jnp.floor((p + 0.5) * inv_nx)                       # p // nx
        gx = p - gy * float(nx)                                  # p %  nx
        gamma = mx * (gx - 0.5) + my * (gy - 0.5)                # (na*no, chunk)

        # xy : (2s - 0.5 + g) * stride = (2*stride)*s + (g - 0.5)*stride
        # wh : (2s)^2 * anchor         = (4*anchor)*s*s
        # cls: s
        dec_ref[0, :, pl.ds(c0, chunk)] = ((alpha * s + beta) * s
                                           + gamma).astype(dec_ref.dtype)

    if n_chunks == 1:
        do_chunk(0)
    else:
        def body(c, carry):
            do_chunk(pl.multiple_of(c * chunk, 128))
            return carry
        lax.fori_loop(0, n_chunks, body, 0, unroll=2)


def _vmem_capacity_bytes():
    try:
        cap = getattr(pltpu.get_tpu_info(), "vmem_capacity_bytes", None)
        if cap:
            return int(cap)
    except Exception:
        pass
    return 64 * 1024 * 1024          # conservative default (v7x per-core VMEM)


def _pick_tile(hw, vmem_cap, bs):
    """Largest multiple-of-128 divisor of hw under a generation-aware cap."""
    # 128 MiB VMEM parts (v5e/v6e) can afford 2048-wide blocks; 64 MiB (v7x) <= 1024.
    max_tile = 2048 if vmem_cap >= 100 * (1 << 20) else 1024
    divs = [t for t in range(128, min(hw, max_tile) + 1, 128) if hw % t == 0]
    if not divs:
        return hw                    # tiny map: one full-extent block
    if bs == 1:
        # v7x has 2 TensorCores: keep >=2 parallel grid steps per level if possible
        multi = [t for t in divs if hw // t >= 2]
        if multi:
            return max(multi)
    return max(divs)


def _vmem_limit_bytes(cin, t_hw, rows, x_bytes, mm_bytes, n_outs, vmem_cap):
    pad8 = lambda v: -(-v // 8) * 8
    padl = lambda v: -(-v // 128) * 128
    est = (2 * pad8(cin) * padl(t_hw) * x_bytes               # x block (double-buffered)
           + 2 * n_outs * pad8(rows) * padl(t_hw) * 4         # output blocks
           + 2 * pad8(rows) * (padl(cin) * mm_bytes + padl(5) * 4)   # weights + consts
           + (4 << 20))                                       # scratch / slack
    return int(max(32 << 20, min(est, int(0.85 * vmem_cap))))


def detect_layer(x_nchw, w, b, anchors_l, stride, na, no,
                 with_raw=False, matmul_dtype=jnp.float32):
    """One detection level: fused 1x1 conv (all anchors) + sigmoid + box decode.

    x_nchw: (bs, cin, ny, nx); w: (na*no, cin) 1x1-conv weight; b: (na*no,)
    anchors_l: (na, 2) anchor_grid (pixel units).
    Returns (z, raw5): z (bs, na*ny*nx, no); raw5 (bs, na, ny, nx, no) or None.
    """
    bs, cin, ny, nx = x_nchw.shape
    hw = ny * nx
    rows = na * no
    stride = float(stride)

    vmem_cap = _vmem_capacity_bytes()
    t_hw = _pick_tile(hw, vmem_cap, bs)
    chunk = 128 if t_hw % 128 == 0 else t_hw

    x_flat = x_nchw.reshape(bs, cin, hw)                 # free reshape (stays NCHW)
    w_mat = w.reshape(rows, cin).astype(matmul_dtype)    # bf16 halves MXU pushes

    # per output-channel decode constants (row r = a*no + j):
    #   [bias, alpha (s^2 coeff), beta (s coeff), stride*mask_x, stride*mask_y]
    jj = jnp.arange(no)
    alpha = jnp.where(jj[None, :] == 2, 4.0 * anchors_l[:, 0:1],
                      jnp.where(jj[None, :] == 3, 4.0 * anchors_l[:, 1:2], 0.0))
    beta = jnp.broadcast_to(jnp.where(jj < 2, 2.0 * stride,
                                      jnp.where(jj < 4, 0.0, 1.0)), (na, no))
    mx = jnp.broadcast_to(jnp.where(jj == 0, stride, 0.0), (na, no))
    my = jnp.broadcast_to(jnp.where(jj == 1, stride, 0.0), (na, no))
    const = jnp.stack([b.reshape(na, no).astype(jnp.float32), alpha, beta, mx, my],
                      axis=-1).reshape(rows, 5).astype(jnp.float32)

    kernel = functools.partial(_detect_kernel, nx=nx, chunk=chunk, with_raw=with_raw)

    out_shapes, out_specs = [], []
    out_blk = pl.BlockSpec((1, rows, t_hw), lambda bi, hi: (bi, 0, hi))
    if with_raw:
        out_shapes.append(jax.ShapeDtypeStruct((bs, rows, hw), jnp.float32))
        out_specs.append(out_blk)
    out_shapes.append(jax.ShapeDtypeStruct((bs, rows, hw), jnp.float32))
    out_specs.append(out_blk)

    outs = pl.pallas_call(
        kernel,
        out_shape=tuple(out_shapes),
        grid=(bs, hw // t_hw),
        in_specs=[
            pl.BlockSpec((1, cin, t_hw), lambda bi, hi: (bi, 0, hi)),
            pl.BlockSpec((rows, cin), lambda bi, hi: (0, 0)),
            pl.BlockSpec((rows, 5), lambda bi, hi: (0, 0)),
        ],
        out_specs=tuple(out_specs),
        compiler_params=pltpu.CompilerParams(
            dimension_semantics=("parallel", "parallel"),
            vmem_limit_bytes=_vmem_limit_bytes(
                cin, t_hw, rows, x_flat.dtype.itemsize,
                jnp.dtype(matmul_dtype).itemsize, len(out_shapes), vmem_cap)),
    )(x_flat, w_mat, const)

    if with_raw:
        raw, dec = outs
        raw5 = jnp.transpose(raw.reshape(bs, na, no, ny, nx), (0, 1, 3, 4, 2))
    else:
        (dec,) = outs
        raw5 = None
    # channel-major -> (..., no)-last: the single post-kernel reorder pass
    z = jnp.transpose(dec.reshape(bs, na, no, hw), (0, 1, 3, 2)).reshape(bs, na * hw, no)
    return z, raw5


def detect_forward(xs, weights, biases, anchors_arr, strides, na, no,
                   with_raw=False, matmul_dtype=jnp.float32):
    """Detect.forward inference path (default flags): returns (cat(z, 1), [x_i]).

    Use with_raw=True for exact module parity (PyTorch also returns the
    post-conv x[i] tensors); with_raw=False skips that writeback entirely.
    """
    zs, raws = [], []
    for i in range(len(xs)):
        z, raw = detect_layer(xs[i], weights[i], biases[i], anchors_arr[i],
                              strides[i], na, no, with_raw=with_raw,
                              matmul_dtype=matmul_dtype)
        zs.append(z)
        raws.append(raw)
    return jnp.concatenate(zs, axis=1), raws


# ----------------------- pure-JAX reference for verification -----------------------
def _ref_layer(x_nchw, w, b, anchors_l, stride, na, no):
    bs, cin, ny, nx = x_nchw.shape
    conv = jnp.einsum('bchw,oc->bohw', x_nchw, w.reshape(na * no, cin)) + b.reshape(1, -1, 1, 1)
    xr = conv.reshape(bs, na, no, ny, nx).transpose(0, 1, 3, 4, 2)      # (bs,na,ny,nx,no)
    y = jax.nn.sigmoid(xr)
    yv, xv = jnp.meshgrid(jnp.arange(ny), jnp.arange(nx), indexing="ij")
    grid = jnp.stack([xv, yv], axis=-1).astype(jnp.float32).reshape(1, 1, ny, nx, 2)
    xy = (y[..., 0:2] * 2.0 - 0.5 + grid) * stride
    wh = (y[..., 2:4] * 2.0) ** 2 * anchors_l.reshape(1, na, 1, 1, 2)
    y = jnp.concatenate([xy, wh, y[..., 4:]], axis=-1)
    return y.reshape(bs, -1, no), xr


if __name__ == "__main__":
    key = jax.random.PRNGKey(0)

    nc = 15
    no = nc + 5
    anchors = ((10., 13., 16., 30., 33., 23.),
               (30., 61., 62., 45., 59., 119.),
               (116., 90., 156., 198., 373., 326.))
    nl = len(anchors)
    na = len(anchors[0]) // 2
    ch = (16, 32, 64)
    strides = (8.0, 16.0, 32.0)
    bs = 2
    spatial = (16, 8, 4)   # feature-map sizes for strides 8/16/32 on a 128x128 image

    anchors_arr = jnp.asarray(anchors, dtype=jnp.float32).reshape(nl, na, 2)

    keys = jax.random.split(key, 3 * nl)
    xs, ws, bsz = [], [], []
    for i in range(nl):
        xs.append(jax.random.normal(keys[3 * i], (bs, ch[i], spatial[i], spatial[i]),
                                    dtype=jnp.float32))
        bound = 1.0 / math.sqrt(ch[i])  # deterministic conv init (uniform, kaiming-like bound)
        ws.append(jax.random.uniform(keys[3 * i + 1], (na * no, ch[i]),
                                     jnp.float32, -bound, bound))
        bsz.append(jax.random.uniform(keys[3 * i + 2], (na * no,),
                                      jnp.float32, -bound, bound))

    # pure-JAX reference of the PyTorch semantics
    z_refs, raw_refs = [], []
    for i in range(nl):
        z_r, x_r = _ref_layer(xs[i], ws[i], bsz[i], anchors_arr[i], strides[i], na, no)
        z_refs.append(z_r)
        raw_refs.append(x_r)
    z_ref_cat = jnp.concatenate(z_refs, axis=1)
    n_total = sum(na * s * s for s in spatial)

    # 1) full module semantics: (cat(z, 1), [x_i])
    z_full, raws = detect_forward(xs, ws, bsz, anchors_arr, strides, na, no,
                                  with_raw=True)
    jax.block_until_ready(z_full)
    assert z_full.shape == (bs, n_total, no)
    assert jnp.allclose(z_full, z_ref_cat, atol=1e-3, rtol=1e-3)
    for got, ref in zip(raws, raw_refs):
        assert got.shape == ref.shape
        assert jnp.allclose(got, ref, atol=1e-3, rtol=1e-3)

    # 2) inference-only path: skip the raw/x[i] writeback (default)
    z_only, raws_none = detect_forward(xs, ws, bsz, anchors_arr, strides, na, no)
    jax.block_until_ready(z_only)
    assert all(r is None for r in raws_none)
    assert jnp.allclose(z_only, z_ref_cat, atol=1e-3, rtol=1e-3)

    # 3) bf16 matmul operands (perf mode): decode stays f32, loose tolerance vs f32 ref
    z_bf16, _ = detect_forward(xs, ws, bsz, anchors_arr, strides, na, no,
                               matmul_dtype=jnp.bfloat16)
    jax.block_until_ready(z_bf16)
    assert jnp.allclose(z_bf16, z_ref_cat, atol=0.5, rtol=0.05)

    print("KERNEL_OK")
</pallas_src>

<mosaic_0001>
module attributes {stable_mosaic.version = 11 : i64} {
  func.func @_detect_kernel(%arg0: i32, %arg1: i32, %arg2: memref<1x16x256xf32, #tpu.memory_space<vmem>>, %arg3: memref<60x16xf32, #tpu.memory_space<vmem>>, %arg4: memref<60x5xf32, #tpu.memory_space<vmem>>, %arg5: memref<1x60x256xf32, #tpu.memory_space<vmem>>, %arg6: memref<1x60x256xf32, #tpu.memory_space<vmem>>) attributes {dimension_semantics = [#tpu.dimension_semantics<parallel>, #tpu.dimension_semantics<parallel>], iteration_bounds = array<i64: 2, 1>, scalar_prefetch = 0 : i64, scratch_operands = 0 : i64, tpu.core_type = #tpu.core_type<tc>, window_params = [{transform_indices = @transform_0, window_bounds = array<i64: 1, 16, 256>}, {pipeline_mode = #tpu.pipeline_mode<synchronous>, transform_indices = @transform_1, window_bounds = array<i64: 60, 16>}, {pipeline_mode = #tpu.pipeline_mode<synchronous>, transform_indices = @transform_2, window_bounds = array<i64: 60, 5>}, {transform_indices = @transform_3, window_bounds = array<i64: 1, 60, 256>}, {transform_indices = @transform_4, window_bounds = array<i64: 1, 60, 256>}]} {
    %c256_i32 = arith.constant 256 : i32
    %0 = arith.muli %arg1, %c256_i32 : i32
    %c0_i32 = arith.constant 0 : i32
    %c128_i32 = arith.constant 128 : i32
    %1 = arith.muli %c0_i32, %c128_i32 : i32
    %2 = tpu.assume_multiple %1, 128 : i32
    %c0 = arith.constant 0 : index
    %c0_0 = arith.constant 0 : index
    %3 = vector.load %arg4[%c0, %c0_0] : memref<60x5xf32, #tpu.memory_space<vmem>>, vector<60x1xf32>
    %c0_1 = arith.constant 0 : index
    %c1 = arith.constant 1 : index
    %4 = vector.load %arg4[%c0_1, %c1] : memref<60x5xf32, #tpu.memory_space<vmem>>, vector<60x1xf32>
    %c0_2 = arith.constant 0 : index
    %c2 = arith.constant 2 : index
    %5 = vector.load %arg4[%c0_2, %c2] : memref<60x5xf32, #tpu.memory_space<vmem>>, vector<60x1xf32>
    %c0_3 = arith.constant 0 : index
    %c3 = arith.constant 3 : index
    %6 = vector.load %arg4[%c0_3, %c3] : memref<60x5xf32, #tpu.memory_space<vmem>>, vector<60x1xf32>
    %c0_4 = arith.constant 0 : index
    %c4 = arith.constant 4 : index
    %7 = vector.load %arg4[%c0_4, %c4] : memref<60x5xf32, #tpu.memory_space<vmem>>, vector<60x1xf32>
    %c0_5 = arith.constant 0 : index
    %c0_6 = arith.constant 0 : index
    %8 = arith.index_cast %2 : i32 to index
    %9 = vector.load %arg2[%c0_5, %c0_6, %8] : memref<1x16x256xf32, #tpu.memory_space<vmem>>, vector<1x16x128xf32>
    %10 = vector.shape_cast %9 : vector<1x16x128xf32> to vector<16x128xf32>
    %c0_7 = arith.constant 0 : index
    %c0_8 = arith.constant 0 : index
    %11 = vector.load %arg3[%c0_7, %c0_8] : memref<60x16xf32, #tpu.memory_space<vmem>>, vector<60x16xf32>
    %cst = arith.constant dense<0.000000e+00> : vector<60x128xf32>
    %12 = tpu.matmul %11, %10, %cst {dimension_numbers = #tpu.dot_dimension_numbers<[1], [0], [0], [1], [0, 0, 1, 1], [], []>} : vector<60x16xf32>, vector<16x128xf32>, vector<60x128xf32> -> vector<60x128xf32>
    %13 = vector.broadcast %3 : vector<60x1xf32> to vector<60x128xf32>
    %14 = arith.addf %12, %13 : vector<60x128xf32>
    %c0_9 = arith.constant 0 : index
    %c0_10 = arith.constant 0 : index
    %15 = arith.index_cast %2 : i32 to index
    %16 = vector.load %arg5[%c0_9, %c0_10, %15] : memref<1x60x256xf32, #tpu.memory_space<vmem>>, vector<1x60x128xf32>
    %17 = vector.shape_cast %16 : vector<1x60x128xf32> to vector<60x128xf32>
    %18 = vector.shape_cast %14 : vector<60x128xf32> to vector<1x60x128xf32>
    tpu.vector_store %arg5[%c0_9, %c0_10, %15], %18 {strides = array<i32>} : memref<1x60x256xf32, #tpu.memory_space<vmem>>, vector<1x60x128xf32>,
    %19 = arith.negf %14 : vector<60x128xf32>
    %20 = math.exp %19 : vector<60x128xf32>
    %cst_11 = arith.constant 1.000000e+00 : f32
    %21 = vector.broadcast %cst_11 : f32 to vector<60x128xf32>
    %22 = arith.addf %21, %20 : vector<60x128xf32>
    %23 = arith.divf %21, %22 : vector<60x128xf32>
    %24 = arith.addi %0, %2 : i32
    %25 = tpu.iota {dimensions = array<i32: 1>} : vector<1x128xi32>
    %26 = vector.broadcast %24 : i32 to vector<1x128xi32>
    %27 = arith.addi %26, %25 : vector<1x128xi32>
    %28 = arith.sitofp %27 : vector<1x128xi32> to vector<1x128xf32>
    %cst_12 = arith.constant 5.000000e-01 : f32
    %29 = vector.broadcast %cst_12 : f32 to vector<1x128xf32>
    %30 = arith.addf %28, %29 : vector<1x128xf32>
    %cst_13 = arith.constant 6.250000e-02 : f32
    %31 = vector.broadcast %cst_13 : f32 to vector<1x128xf32>
    %32 = arith.mulf %30, %31 : vector<1x128xf32>
    %33 = math.floor %32 : vector<1x128xf32>
    %cst_14 = arith.constant 1.600000e+01 : f32
    %34 = vector.broadcast %cst_14 : f32 to vector<1x128xf32>
    %35 = arith.mulf %33, %34 : vector<1x128xf32>
    %36 = arith.subf %28, %35 : vector<1x128xf32>
    %cst_15 = arith.constant 5.000000e-01 : f32
    %37 = vector.broadcast %cst_15 : f32 to vector<1x128xf32>
    %38 = arith.subf %36, %37 : vector<1x128xf32>
    %39 = vector.broadcast %6 : vector<60x1xf32> to vector<60x128xf32>
    %40 = vector.broadcast %38 : vector<1x128xf32> to vector<60x128xf32>
    %41 = arith.mulf %39, %40 : vector<60x128xf32>
    %cst_16 = arith.constant 5.000000e-01 : f32
    %42 = vector.broadcast %cst_16 : f32 to vector<1x128xf32>
    %43 = arith.subf %33, %42 : vector<1x128xf32>
    %44 = vector.broadcast %7 : vector<60x1xf32> to vector<60x128xf32>
    %45 = vector.broadcast %43 : vector<1x128xf32> to vector<60x128xf32>
    %46 = arith.mulf %44, %45 : vector<60x128xf32>
    %47 = arith.addf %41, %46 : vector<60x128xf32>
    %48 = vector.broadcast %4 : vector<60x1xf32> to vector<60x128xf32>
    %49 = arith.mulf %48, %23 : vector<60x128xf32>
    %50 = vector.broadcast %5 : vector<60x1xf32> to vector<60x128xf32>
    %51 = arith.addf %49, %50 : vector<60x128xf32>
    %52 = arith.mulf %51, %23 : vector<60x128xf32>
    %53 = arith.addf %52, %47 : vector<60x128xf32>
    %c0_17 = arith.constant 0 : index
    %c0_18 = arith.constant 0 : index
    %54 = arith.index_cast %2 : i32 to index
    %55 = vector.load %arg6[%c0_17, %c0_18, %54] : memref<1x60x256xf32, #tpu.memory_space<vmem>>, vector<1x60x128xf32>
    %56 = vector.shape_cast %55 : vector<1x60x128xf32> to vector<60x128xf32>
    %57 = vector.shape_cast %53 : vector<60x128xf32> to vector<1x60x128xf32>
    tpu.vector_store %arg6[%c0_17, %c0_18, %54], %57 {strides = array<i32>} : memref<1x60x256xf32, #tpu.memory_space<vmem>>, vector<1x60x128xf32>,
    %c1_i32 = arith.constant 1 : i32
    %c128_i32_19 = arith.constant 128 : i32
    %58 = arith.muli %c1_i32, %c128_i32_19 : i32
    %59 = tpu.assume_multiple %58, 128 : i32
    %c0_20 = arith.constant 0 : index
    %c0_21 = arith.constant 0 : index
    %60 = vector.load %arg4[%c0_20, %c0_21] : memref<60x5xf32, #tpu.memory_space<vmem>>, vector<60x1xf32>
    %c0_22 = arith.constant 0 : index
    %c1_23 = arith.constant 1 : index
    %61 = vector.load %arg4[%c0_22, %c1_23] : memref<60x5xf32, #tpu.memory_space<vmem>>, vector<60x1xf32>
    %c0_24 = arith.constant 0 : index
    %c2_25 = arith.constant 2 : index
    %62 = vector.load %arg4[%c0_24, %c2_25] : memref<60x5xf32, #tpu.memory_space<vmem>>, vector<60x1xf32>
    %c0_26 = arith.constant 0 : index
    %c3_27 = arith.constant 3 : index
    %63 = vector.load %arg4[%c0_26, %c3_27] : memref<60x5xf32, #tpu.memory_space<vmem>>, vector<60x1xf32>
    %c0_28 = arith.constant 0 : index
    %c4_29 = arith.constant 4 : index
    %64 = vector.load %arg4[%c0_28, %c4_29] : memref<60x5xf32, #tpu.memory_space<vmem>>, vector<60x1xf32>
    %c0_30 = arith.constant 0 : index
    %c0_31 = arith.constant 0 : index
    %65 = arith.index_cast %59 : i32 to index
    %66 = vector.load %arg2[%c0_30, %c0_31, %65] : memref<1x16x256xf32, #tpu.memory_space<vmem>>, vector<1x16x128xf32>
    %67 = vector.shape_cast %66 : vector<1x16x128xf32> to vector<16x128xf32>
    %c0_32 = arith.constant 0 : index
    %c0_33 = arith.constant 0 : index
    %68 = vector.load %arg3[%c0_32, %c0_33] : memref<60x16xf32, #tpu.memory_space<vmem>>, vector<60x16xf32>
    %cst_34 = arith.constant dense<0.000000e+00> : vector<60x128xf32>
    %69 = tpu.matmul %68, %67, %cst_34 {dimension_numbers = #tpu.dot_dimension_numbers<[1], [0], [0], [1], [0, 0, 1, 1], [], []>} : vector<60x16xf32>, vector<16x128xf32>, vector<60x128xf32> -> vector<60x128xf32>
    %70 = vector.broadcast %60 : vector<60x1xf32> to vector<60x128xf32>
    %71 = arith.addf %69, %70 : vector<60x128xf32>
    %c0_35 = arith.constant 0 : index
    %c0_36 = arith.constant 0 : index
    %72 = arith.index_cast %59 : i32 to index
    %73 = vector.load %arg5[%c0_35, %c0_36, %72] : memref<1x60x256xf32, #tpu.memory_space<vmem>>, vector<1x60x128xf32>
    %74 = vector.shape_cast %73 : vector<1x60x128xf32> to vector<60x128xf32>
    %75 = vector.shape_cast %71 : vector<60x128xf32> to vector<1x60x128xf32>
    tpu.vector_store %arg5[%c0_35, %c0_36, %72], %75 {strides = array<i32>} : memref<1x60x256xf32, #tpu.memory_space<vmem>>, vector<1x60x128xf32>,
    %76 = arith.negf %71 : vector<60x128xf32>
    %77 = math.exp %76 : vector<60x128xf32>
    %cst_37 = arith.constant 1.000000e+00 : f32
    %78 = vector.broadcast %cst_37 : f32 to vector<60x128xf32>
    %79 = arith.addf %78, %77 : vector<60x128xf32>
    %80 = arith.divf %78, %79 : vector<60x128xf32>
    %81 = arith.addi %0, %59 : i32
    %82 = tpu.iota {dimensions = array<i32: 1>} : vector<1x128xi32>
    %83 = vector.broadcast %81 : i32 to vector<1x128xi32>
    %84 = arith.addi %83, %82 : vector<1x128xi32>
    %85 = arith.sitofp %84 : vector<1x128xi32> to vector<1x128xf32>
    %cst_38 = arith.constant 5.000000e-01 : f32
    %86 = vector.broadcast %cst_38 : f32 to vector<1x128xf32>
    %87 = arith.addf %85, %86 : vector<1x128xf32>
    %cst_39 = arith.constant 6.250000e-02 : f32
    %88 = vector.broadcast %cst_39 : f32 to vector<1x128xf32>
    %89 = arith.mulf %87, %88 : vector<1x128xf32>
    %90 = math.floor %89 : vector<1x128xf32>
    %cst_40 = arith.constant 1.600000e+01 : f32
    %91 = vector.broadcast %cst_40 : f32 to vector<1x128xf32>
    %92 = arith.mulf %90, %91 : vector<1x128xf32>
    %93 = arith.subf %85, %92 : vector<1x128xf32>
    %cst_41 = arith.constant 5.000000e-01 : f32
    %94 = vector.broadcast %cst_41 : f32 to vector<1x128xf32>
    %95 = arith.subf %93, %94 : vector<1x128xf32>
    %96 = vector.broadcast %63 : vector<60x1xf32> to vector<60x128xf32>
    %97 = vector.broadcast %95 : vector<1x128xf32> to vector<60x128xf32>
    %98 = arith.mulf %96, %97 : vector<60x128xf32>
    %cst_42 = arith.constant 5.000000e-01 : f32
    %99 = vector.broadcast %cst_42 : f32 to vector<1x128xf32>
    %100 = arith.subf %90, %99 : vector<1x128xf32>
    %101 = vector.broadcast %64 : vector<60x1xf32> to vector<60x128xf32>
    %102 = vector.broadcast %100 : vector<1x128xf32> to vector<60x128xf32>
    %103 = arith.mulf %101, %102 : vector<60x128xf32>
    %104 = arith.addf %98, %103 : vector<60x128xf32>
    %105 = vector.broadcast %61 : vector<60x1xf32> to vector<60x128xf32>
    %106 = arith.mulf %105, %80 : vector<60x128xf32>
    %107 = vector.broadcast %62 : vector<60x1xf32> to vector<60x128xf32>
    %108 = arith.addf %106, %107 : vector<60x128xf32>
    %109 = arith.mulf %108, %80 : vector<60x128xf32>
    %110 = arith.addf %109, %104 : vector<60x128xf32>
    %c0_43 = arith.constant 0 : index
    %c0_44 = arith.constant 0 : index
    %111 = arith.index_cast %59 : i32 to index
    %112 = vector.load %arg6[%c0_43, %c0_44, %111] : memref<1x60x256xf32, #tpu.memory_space<vmem>>, vector<1x60x128xf32>
    %113 = vector.shape_cast %112 : vector<1x60x128xf32> to vector<60x128xf32>
    %114 = vector.shape_cast %110 : vector<60x128xf32> to vector<1x60x128xf32>
    tpu.vector_store %arg6[%c0_43, %c0_44, %111], %114 {strides = array<i32>} : memref<1x60x256xf32, #tpu.memory_space<vmem>>, vector<1x60x128xf32>,
    %c2_i32 = arith.constant 2 : i32
    return
  }
  func.func @transform_0(%arg0: i32, %arg1: i32) -> (i32, i32, i32) {
    %c0_i32 = arith.constant 0 : i32
    %c0_i32_0 = arith.constant 0 : i32
    return %arg0, %c0_i32, %arg1 : i32, i32, i32
  }
  func.func @transform_1(%arg0: i32, %arg1: i32) -> (i32, i32) {
    %c0_i32 = arith.constant 0 : i32
    %c0_i32_0 = arith.constant 0 : i32
    %c0_i32_1 = arith.constant 0 : i32
    return %c0_i32, %c0_i32_0 : i32, i32
  }
  func.func @transform_2(%arg0: i32, %arg1: i32) -> (i32, i32) {
    %c0_i32 = arith.constant 0 : i32
    %c0_i32_0 = arith.constant 0 : i32
    %c0_i32_1 = arith.constant 0 : i32
    return %c0_i32, %c0_i32_0 : i32, i32
  }
  func.func @transform_3(%arg0: i32, %arg1: i32) -> (i32, i32, i32) {
    %c0_i32 = arith.constant 0 : i32
    %c0_i32_0 = arith.constant 0 : i32
    return %arg0, %c0_i32, %arg1 : i32, i32, i32
  }
  func.func @transform_4(%arg0: i32, %arg1: i32) -> (i32, i32, i32) {
    %c0_i32 = arith.constant 0 : i32
    %c0_i32_0 = arith.constant 0 : i32
    return %arg0, %c0_i32, %arg1 : i32, i32, i32
  }
}

</mosaic_0001>

<llo_original>
// kernel: tpu_custom_call.1
$region0: #{tpu_custom_call.1}
  #allocation0 [shape = 'u32[]', space=smem, size = 0x4, offset = 0x4, fixed_abs, tag = 'smem constant byte address 0x4 - core index']
  #allocation1 [shape = 'u32[144,128]{1,0:T(1,128)}', space=vmem, size = 0x12000, scoped, tag = 'internal scratch']
  %s0 = inlined_call_operand.vmem [shape: f32[2,16,256], index: 0, kind: input, shape index: {}]
  %s1 = inlined_call_operand.vmem [shape: f32[60,16], index: 1, kind: input, shape index: {}]
  %s2 = inlined_call_operand.vmem [shape: f32[60,5], index: 2, kind: input, shape index: {}]
  %s3 = inlined_call_operand.vmem [shape: f32[2,60,256], index: 3, kind: output, shape index: {0}]
  %s4 = inlined_call_operand.vmem [shape: f32[2,60,256], index: 4, kind: output, shape index: {1}]
  %5 = xla_tuple %s3, %s4
  %s6 = sld [smem:[#allocation0]]
  $region53: #{tpu_custom_call.1} parent=0
    _
  %s8 = ssub.s32 1, %s6
  %s9 = scalar_select 0, %s8, %s6
  loop: start=0, step=1, limit=4
  $region2: #{tpu_custom_call.1} parent=0 // loop_pre_header
    _
  $region3: #{tpu_custom_call.1} parent=0 // loop_header
    %s11 = sphi 0, %s15
    %p12 = scmp.ge.s32.totalorder %s11, 4
    %s18 = sphi 0, %s30
    %s19 = sphi 0, %s26
    %s20 = sphi 0, %s18
    %s21 = sphi 0, %s19
    %s22 = sphi 0, %s20
    %s23 = sphi 0, %s21
    %s35 = sphi 0, %s37
    %s38 = sphi 0, %s35
    %s39 = sphi 0, %s38
    %s55 = sphi 0, %s39
    %s59 = sphi 0, %s59
    %s61 = sphi 0, %s59
    %s62 = sphi 0, %s61
    %s76 = sphi 0, %s62
    %s80 = sphi 0, %s80
    %s82 = sphi 0, %s80
    %s83 = sphi 0, %s82
    %s97 = sphi 0, %s83
    %s105 = sphi 0, %s107
    %s108 = sphi 0, %s105
    %s109 = sphi 0, %s108
    %s125 = sphi 0, %s109
    %s133 = sphi 0, %s135
    %s136 = sphi 0, %s133
    %s137 = sphi 0, %s136
    %s153 = sphi 0, %s137
  $region4: #{tpu_custom_call.1} parent=0 // loop_header_branch
    %14 = sbr.rel (%p12) target = $region8
  $region5: #{tpu_custom_call.1} parent=0 // loop_body
    %s16 = ssub.s32 %s11, 1
    %s17 = ssub.s32 %s11, 2
    %s24 = sadd.s32 1, %s19
    %p25 = scmp.ge.s32.totalorder %s24, 1
    %s26 = scalar_select %p25, 0, %s24
    %s27 = sadd.s32 1, %s18
    %s28 = scalar_select %p25, %s27, %s18
    %p29 = scmp.ge.s32.totalorder %s28, 2
    %s30 = scalar_select %p29, 0, %s28
    %s31 = ssub.s32 %s18, %s30
    %s32 = ssub.s32 %s19, %s26
    %s33 = sor.u32 %s31, %s32
    %p34 = scmp.eq.s32.totalorder %s33, 0
    %s36 = sadd.s32 %s35, 1
    %s37 = scalar_select %p34, %s35, %s36
    %p40 = pneg %p34
    %p41 = scmp.eq.s32.totalorder %s11, 1
    %p42 = por %p40, %p41
    %p43 = scmp.ne.s32.totalorder %s35, %s38
    %p44 = scmp.eq.s32.totalorder %s11, 0
    %p45 = por %p43, %p44
    %p46 = scmp.ne.s32.totalorder %s35, %s38
    %p47 = scmp.eq.s32.totalorder %s16, 1
    %p48 = por %p46, %p47
    %p49 = scmp.ne.s32.totalorder %s38, %s39
    %p50 = scmp.eq.s32.totalorder %s16, 0
    %p51 = por %p49, %p50
    %p52 = scmp.ne.s32.totalorder %s38, %s39
    %p53 = scmp.eq.s32.totalorder %s17, 1
    %p54 = por %p52, %p53
    %p56 = scmp.ne.s32.totalorder %s39, %s55
    %p57 = scmp.eq.s32.totalorder %s17, 0
    %p58 = por %p56, %p57
    %s60 = sadd.s32 %s59, 1
    %p63 = scmp.eq.s32.totalorder %s11, 1
    %p64 = scmp.ne.s32.totalorder %s59, %s61
    %p65 = scmp.eq.s32.totalorder %s11, 0
    %p66 = por %p64, %p65
    %p67 = scmp.ne.s32.totalorder %s59, %s61
    %p68 = scmp.eq.s32.totalorder %s16, 1
    %p69 = por %p67, %p68
    %p70 = scmp.ne.s32.totalorder %s61, %s62
    %p71 = scmp.eq.s32.totalorder %s16, 0
    %p72 = por %p70, %p71
    %p73 = scmp.ne.s32.totalorder %s61, %s62
    %p74 = scmp.eq.s32.totalorder %s17, 1
    %p75 = por %p73, %p74
    %p77 = scmp.ne.s32.totalorder %s62, %s76
    %p78 = scmp.eq.s32.totalorder %s17, 0
    %p79 = por %p77, %p78
    %s81 = sadd.s32 %s80, 1
    %p84 = scmp.eq.s32.totalorder %s11, 1
    %p85 = scmp.ne.s32.totalorder %s80, %s82
    %p86 = scmp.eq.s32.totalorder %s11, 0
    %p87 = por %p85, %p86
    %p88 = scmp.ne.s32.totalorder %s80, %s82
    %p89 = scmp.eq.s32.totalorder %s16, 1
    %p90 = por %p88, %p89
    %p91 = scmp.ne.s32.totalorder %s82, %s83
    %p92 = scmp.eq.s32.totalorder %s16, 0
    %p93 = por %p91, %p92
    %p94 = scmp.ne.s32.totalorder %s82, %s83
    %p95 = scmp.eq.s32.totalorder %s17, 1
    %p96 = por %p94, %p95
    %p98 = scmp.ne.s32.totalorder %s83, %s97
    %p99 = scmp.eq.s32.totalorder %s17, 0
    %p100 = por %p98, %p99
    %s101 = ssub.s32 %s18, %s30
    %s102 = ssub.s32 %s19, %s26
    %s103 = sor.u32 %s101, %s102
    %p104 = scmp.eq.s32.totalorder %s103, 0
    %s106 = sadd.s32 %s105, 1
    %s107 = scalar_select %p104, %s105, %s106
    %p110 = pneg %p104
    %p111 = scmp.eq.s32.totalorder %s11, 1
    %p112 = por %p110, %p111
    %p113 = scmp.ne.s32.totalorder %s105, %s108
    %p114 = scmp.eq.s32.totalorder %s11, 0
    %p115 = por %p113, %p114
    %p116 = scmp.ne.s32.totalorder %s105, %s108
    %p117 = scmp.eq.s32.totalorder %s16, 1
    %p118 = por %p116, %p117
    %p119 = scmp.ne.s32.totalorder %s108, %s109
    %p120 = scmp.eq.s32.totalorder %s16, 0
    %p121 = por %p119, %p120
    %p122 = scmp.ne.s32.totalorder %s108, %s109
    %p123 = scmp.eq.s32.totalorder %s17, 1
    %p124 = por %p122, %p123
    %p126 = scmp.ne.s32.totalorder %s109, %s125
    %p127 = scmp.eq.s32.totalorder %s17, 0
    %p128 = por %p126, %p127
    %s129 = ssub.s32 %s18, %s30
    %s130 = ssub.s32 %s19, %s26
    %s131 = sor.u32 %s129, %s130
    %p132 = scmp.eq.s32.totalorder %s131, 0
    %s134 = sadd.s32 %s133, 1
    %s135 = scalar_select %p132, %s133, %s134
    %p138 = pneg %p132
    %p139 = scmp.eq.s32.totalorder %s11, 1
    %p140 = por %p138, %p139
    %p141 = scmp.ne.s32.totalorder %s133, %s136
    %p142 = scmp.eq.s32.totalorder %s11, 0
    %p143 = por %p141, %p142
    %p144 = scmp.ne.s32.totalorder %s133, %s136
    %p145 = scmp.eq.s32.totalorder %s16, 1
    %p146 = por %p144, %p145
    %p147 = scmp.ne.s32.totalorder %s136, %s137
    %p148 = scmp.eq.s32.totalorder %s16, 0
    %p149 = por %p147, %p148
    %p150 = scmp.ne.s32.totalorder %s136, %s137
    %p151 = scmp.eq.s32.totalorder %s17, 1
    %p152 = por %p150, %p151
    %p154 = scmp.ne.s32.totalorder %s137, %s153
    %p155 = scmp.eq.s32.totalorder %s17, 0
    %p156 = por %p154, %p155
    %p157 = scmp.le.s32.totalorder 1, %s11
    %p158 = scmp.lt.s32.totalorder %s11, 3
    %p159 = pnand %p157, %p158
    %p160 = pneg %p159
    // Predicated region
    $region9: #{tpu_custom_call.1} parent=5 // pred_check
      _
    $region10: #{tpu_custom_call.1} parent=5 // pred_check_branch
      %162 = sbr.rel (%p159) target = $region12
    $region11: #{tpu_custom_call.1} parent=5 // pred_region
      %s163 = ssub.s32 %s11, 1
      // Predicated region
      $region13: #{tpu_custom_call.1} parent=11 // pred_check
        %p164 = pneg %p72
      $region14: #{tpu_custom_call.1} parent=11 // pred_check_branch
        %166 = sbr.rel (%p164) target = $region16
      $region15: #{tpu_custom_call.1} parent=11 // pred_region
        _
      $region16: #{tpu_custom_call.1} parent=11 // pred_fallthru
        _
      // Predicated region
      $region17: #{tpu_custom_call.1} parent=11 // pred_check
        %p167 = pneg %p93
      $region18: #{tpu_custom_call.1} parent=11 // pred_check_branch
        %169 = sbr.rel (%p167) target = $region20
      $region19: #{tpu_custom_call.1} parent=11 // pred_region
        _
      $region20: #{tpu_custom_call.1} parent=11 // pred_fallthru
        _
    $region12: #{tpu_custom_call.1} parent=5 // pred_fallthru
      _
    %p170 = scmp.lt.s32.totalorder %s11, 2
    // Predicated region
    $region21: #{tpu_custom_call.1} parent=5 // pred_check
      %p171 = pneg %p170
    $region22: #{tpu_custom_call.1} parent=5 // pred_check_branch
      %173 = sbr.rel (%p171) target = $region24
    $region23: #{tpu_custom_call.1} parent=5 // pred_region
      // Predicated region
      $region25: #{tpu_custom_call.1} parent=23 // pred_check
        %p174 = pneg %p45
      $region26: #{tpu_custom_call.1} parent=23 // pred_check_branch
        %176 = sbr.rel (%p174) target = $region28
      $region27: #{tpu_custom_call.1} parent=23 // pred_region
        %s177 = smul.u32 2, %s19
        %p178 = scmp.lt.s32.totalorder %s18, 1
        %s179 = scalar_select %p178, %s18, 1
        %p180 = scmp.lt.s32.totalorder %s177, 1
        %s181 = scalar_select %p180, %s177, 1
        %s182 = smul.addr %s179, 4
        %s183 = sadd.s32 %s181, %s182
        %s184 = smul.addr %s183, 8
        %s185 = scalar_lea.vmem %s0, %s184
        %s186 = smul.u32 2, %s19
      $region28: #{tpu_custom_call.1} parent=23 // pred_fallthru
        _
    $region24: #{tpu_custom_call.1} parent=5 // pred_fallthru
      _
    %p187 = scmp.le.s32.totalorder 1, %s11
    %p188 = scmp.lt.s32.totalorder %s11, 3
    %p189 = pnand %p187, %p188
    %p190 = pneg %p189
    // Predicated region
    $region29: #{tpu_custom_call.1} parent=5 // pred_check
      _
    $region30: #{tpu_custom_call.1} parent=5 // pred_check_branch
      %192 = sbr.rel (%p189) target = $region32
    $region31: #{tpu_custom_call.1} parent=5 // pred_region
      %s193 = ssub.s32 %s11, 1
      %s194 = smul.u32 2, %s21
      %p195 = scmp.lt.s32.totalorder %s20, 1
      %s196 = scalar_select %p195, %s20, 1
      %p197 = scmp.lt.s32.totalorder %s194, 1
      %s198 = scalar_select %p197, %s194, 1
      %s199 = smul.addr %s196, 4
      %s200 = sadd.s32 %s198, %s199
      %s201 = smul.addr %s200, 8
      %s202 = scalar_lea.vmem %s0, %s201
      %p203 = pneg %p51
      %p204 = pneg %p48
      %p205 = pneg %p72
      %p206 = pneg %p69
      %p207 = pneg %p93
      %p208 = pneg %p90
      %p209 = pneg %p121
      %p210 = pneg %p118
      %s211 = smul.u32 2, %s21
      %p212 = scmp.lt.s32.totalorder %s20, 1
      %s213 = scalar_select %p212, %s20, 1
      %p214 = scmp.lt.s32.totalorder %s211, 1
      %s215 = scalar_select %p214, %s211, 1
      %s216 = smul.addr %s213, 16
      %s217 = sadd.s32 %s215, %s216
      %s218 = smul.addr %s217, 8
      %s219 = scalar_lea.vmem %s3, %s218
      %p220 = pneg %p149
      %p221 = pneg %p146
      %s222 = smul.u32 2, %s21
      %p223 = scmp.lt.s32.totalorder %s20, 1
      %s224 = scalar_select %p223, %s20, 1
      %p225 = scmp.lt.s32.totalorder %s222, 1
      %s226 = scalar_select %p225, %s222, 1
      %s227 = smul.addr %s224, 16
      %s228 = sadd.s32 %s226, %s227
      %s229 = smul.addr %s228, 8
      %s230 = scalar_lea.vmem %s4, %s229
      %s231 = smul.u32 2, %s21
      %p232 = scmp.lt.s32.totalorder %s20, 1
      %s233 = scalar_select %p232, %s20, 1
      %p234 = scmp.lt.s32.totalorder %s231, 1
      %s235 = scalar_select %p234, %s231, 1
      %s236 = smul.addr %s233, 4
      %s237 = sadd.s32 %s235, %s236
      %s238 = smul.addr %s237, 8
      %s239 = scalar_lea.vmem %s0, %s238
      %s240 = smul.u32 2, %s21
      %s241 = smul.u32 2, %s21
      %p242 = scmp.lt.s32.totalorder %s20, 1
      %s243 = scalar_select %p242, %s20, 1
      %p244 = scmp.lt.s32.totalorder %s241, 1
      %s245 = scalar_select %p244, %s241, 1
      %s246 = smul.addr %s243, 16
      %s247 = sadd.s32 %s245, %s246
      %s248 = smul.addr %s247, 8
      %s249 = scalar_lea.vmem %s3, %s248
      %s250 = smul.u32 2, %s21
      %s251 = smul.u32 2, %s21
      %p252 = scmp.lt.s32.totalorder %s20, 1
      %s253 = scalar_select %p252, %s20, 1
      %p254 = scmp.lt.s32.totalorder %s251, 1
      %s255 = scalar_select %p254, %s251, 1
      %s256 = smul.addr %s253, 16
      %s257 = sadd.s32 %s255, %s256
      %s258 = smul.addr %s257, 8
      %s259 = scalar_lea.vmem %s4, %s258
      %s260 = smul.u32 2, %s21
      %s261 = smul.u32 %s21, 256
      %v262 = vld [vmem:[%s2] sm:$0xff]
      %v263 = vld [vmem:[%s2 + $0x8] sm:$0xff]
      %v264 = vld [vmem:[%s2 + $0x10] sm:$0xff]
      %v265 = vld [vmem:[%s2 + $0x18] sm:$0xff]
      %v266 = vld [vmem:[%s2 + $0x20] sm:$0xff]
      %v267 = vld [vmem:[%s2 + $0x28] sm:$0xff]
      %v268 = vld [vmem:[%s2 + $0x30] sm:$0xff]
      %v269 = vld [vmem:[%s2 + $0x38] sm:$0xf]
      %v270 = vld [vmem:[%s239] sm:$0xff]
      %v271 = vld [vmem:[%s239 + $0x10] sm:$0xff]
      %v272 = vld [vmem:[%s1] sm:$0xff]
      %v273 = vld [vmem:[%s1 + $0x8] sm:$0xff]
      %v274 = vld [vmem:[%s1 + $0x10] sm:$0xff]
      %v275 = vld [vmem:[%s1 + $0x18] sm:$0xff]
      %v276 = vld [vmem:[%s1 + $0x20] sm:$0xff]
      %v277 = vld [vmem:[%s1 + $0x28] sm:$0xff]
      %v278 = vld [vmem:[%s1 + $0x30] sm:$0xff]
      %v279 = vld [vmem:[%s1 + $0x38] sm:$0xf]
      %281 = vset.pattern.permute.xlu0 0
      %282 = vperm.xlu0 %281, %v262
      %v283 = vpop.permute.xlu0 %282
      %286 = vset.pattern.permute.xlu0 0
      %287 = vperm.xlu0 %286, %v263
      %v288 = vpop.permute.xlu0 %287
      %291 = vset.pattern.permute.xlu0 0
      %292 = vperm.xlu0 %291, %v264
      %v293 = vpop.permute.xlu0 %292
      %296 = vset.pattern.permute.xlu0 0
      %297 = vperm.xlu0 %296, %v265
      %v298 = vpop.permute.xlu0 %297
      %301 = vset.pattern.permute.xlu0 0
      %302 = vperm.xlu0 %301, %v266
      %v303 = vpop.permute.xlu0 %302
      %306 = vset.pattern.permute.xlu0 0
      %307 = vperm.xlu0 %306, %v267
      %v308 = vpop.permute.xlu0 %307
      %311 = vset.pattern.permute.xlu0 0
      %312 = vperm.xlu0 %311, %v268
      %v313 = vpop.permute.xlu0 %312
      %316 = vset.pattern.permute.xlu0 0
      %317 = vperm.xlu0 %316, %v269
      %v318 = vpop.permute.xlu0 %317
      %vm320 = vcmask 130048
      %v322 = vsel %vm320, %v272, 0
      %v325 = vsel %vm320, %v273, 0
      %v328 = vsel %vm320, %v274, 0
      %v331 = vsel %vm320, %v275, 0
      %v334 = vsel %vm320, %v276, 0
      %v337 = vsel %vm320, %v277, 0
      %v340 = vsel %vm320, %v278, 0
      %v343 = vsel %vm320, %v279, 0
      %345 = vmatprep.subr.mxu0 0.0
      %346 = vmatpush1.msra.mxu0 %v270
      %347 = vmatprep.subr.mxu0 0.0
      %348 = vmatpush1.msra.mxu0 %v271
      %349 = vmatprep.subr.mxu0 0.0
      %350 = vmatpush1.msra.mxu0 0.0
      %351 = vmatprep.subr.mxu0 0.0
      %352 = vmatpush1.msra.mxu0 0.0
      %353 = vmatprep.subr.mxu0 0.0
      %354 = vmatpush1.msra.mxu0 0.0
      %355 = vmatprep.subr.mxu0 0.0
      %356 = vmatpush1.msra.mxu0 0.0
      %357 = vmatprep.subr.mxu0 0.0
      %358 = vmatpush1.msra.mxu0 0.0
      %359 = vmatprep.subr.mxu0 0.0
      %360 = vmatpush1.msra.mxu0 0.0
      %361 = vmatprep.subr.mxu0 0.0
      %362 = vmatpush1.msra.mxu0 0.0
      %363 = vmatprep.subr.mxu0 0.0
      %364 = vmatpush1.msra.mxu0 0.0
      %365 = vmatprep.subr.mxu0 0.0
      %366 = vmatpush1.msra.mxu0 0.0
      %367 = vmatprep.subr.mxu0 0.0
      %368 = vmatpush1.msra.mxu0 0.0
      %369 = vmatprep.subr.mxu0 0.0
      %370 = vmatpush1.msra.mxu0 0.0
      %371 = vmatprep.subr.mxu0 0.0
      %372 = vmatpush1.msra.mxu0 0.0
      %373 = vmatprep.subr.mxu0 0.0
      %374 = vmatpush1.msra.mxu0 0.0
      %375 = vmatprep.subr.mxu0 0.0
      %376 = vmatpush1.msra.mxu0 0.0
      %377 = vmatprep.subr.mxu0 0.0
      %378 = vmatpush1.msra.mxu0 0.0
      %379 = vmatprep.subr.mxu0 0.0
      %380 = vmatpush1.msra.mxu0 0.0
      %381 = vmatprep.subr.mxu0 0.0
      %382 = vmatpush1.msra.mxu0 0.0
      %383 = vmatprep.subr.mxu0 0.0
      %384 = vmatpush1.msra.mxu0 0.0
      %385 = vmatprep.subr.mxu0 0.0
      %386 = vmatpush1.msra.mxu0 0.0
      %387 = vmatprep.subr.mxu0 0.0
      %388 = vmatpush1.msra.mxu0 0.0
      %389 = vmatprep.subr.mxu0 0.0
      %390 = vmatpush1.msra.mxu0 0.0
      %391 = vmatprep.subr.mxu0 0.0
      %392 = vmatpush1.msra.mxu0 0.0
      %393 = vmatprep.subr.mxu0 0.0
      %394 = vmatpush1.msra.mxu0 0.0
      %395 = vmatprep.subr.mxu0 0.0
      %396 = vmatpush1.msra.mxu0 0.0
      %397 = vmatprep.subr.mxu0 0.0
      %398 = vmatpush1.msra.mxu0 0.0
      %399 = vmatprep.subr.mxu0 0.0
      %400 = vmatpush1.msra.mxu0 0.0
      %401 = vmatprep.subr.mxu0 0.0
      %402 = vmatpush1.msra.mxu0 0.0
      %403 = vmatprep.subr.mxu0 0.0
      %404 = vmatpush1.msra.mxu0 0.0
      %405 = vmatprep.subr.mxu0 0.0
      %406 = vmatpush1.msra.mxu0 0.0
      %407 = vmatprep.subr.mxu0 0.0
      %408 = vmatpush1.msra.mxu0 0.0
      %409 = vmatprep.mubr.f32.mxu0 0.0
      %410 = vmatmul.mubr.f32.gmra.mrb[0].mxu0 %v322
      %v411 = vpop.f32.mrb[0].mxu0
      %v412 = vadd.f32 %v283, %v411
      %v413 = vpop.f32.mrb[0].mxu0
      %414 = vmatprep.mubr.f32.mxu0 0.0
      %415 = vmatmul.mubr.f32.gmra.mrb[0].mxu0 %v325
      %v416 = vpop.f32.mrb[0].mxu0
      %v417 = vadd.f32 %v288, %v416
      %v418 = vpop.f32.mrb[0].mxu0
      %419 = vmatprep.mubr.f32.mxu0 0.0
      %420 = vmatmul.mubr.f32.gmra.mrb[0].mxu0 %v328
      %v421 = vpop.f32.mrb[0].mxu0
      %v422 = vadd.f32 %v293, %v421
      %v423 = vpop.f32.mrb[0].mxu0
      %424 = vmatprep.mubr.f32.mxu0 0.0
      %425 = vmatmul.mubr.f32.gmra.mrb[0].mxu0 %v331
      %v426 = vpop.f32.mrb[0].mxu0
      %v427 = vadd.f32 %v298, %v426
      %v428 = vpop.f32.mrb[0].mxu0
      %429 = vmatprep.mubr.f32.mxu0 0.0
      %430 = vmatmul.mubr.f32.gmra.mrb[0].mxu0 %v334
      %v431 = vpop.f32.mrb[0].mxu0
      %v432 = vadd.f32 %v303, %v431
      %v433 = vpop.f32.mrb[0].mxu0
      %434 = vmatprep.mubr.f32.mxu0 0.0
      %435 = vmatmul.mubr.f32.gmra.mrb[0].mxu0 %v337
      %v436 = vpop.f32.mrb[0].mxu0
      %v437 = vadd.f32 %v308, %v436
      %v438 = vpop.f32.mrb[0].mxu0
      %439 = vmatprep.mubr.f32.mxu0 0.0
      %440 = vmatmul.mubr.f32.gmra.mrb[0].mxu0 %v340
      %v441 = vpop.f32.mrb[0].mxu0
      %v442 = vadd.f32 %v313, %v441
      %v443 = vpop.f32.mrb[0].mxu0
      %444 = vmatprep.mubr.f32.mxu0 0.0
      %445 = vmatmul.mubr.f32.gmra.mrb[0].mxu0 %v343
      %v446 = vpop.f32.mrb[0].mxu0
      %v447 = vadd.f32 %v318, %v446
      %v448 = vpop.f32.mrb[0].mxu0
      %449 = vdwg.mxu0
      %450 = vst [vmem:[%s249] sm:$0xff] %v412
      %451 = vst [vmem:[%s249 + $0x10] sm:$0xff] %v417
      %452 = vst [vmem:[%s249 + $0x20] sm:$0xff] %v422
      %453 = vst [vmem:[%s249 + $0x30] sm:$0xff] %v427
      %454 = vst [vmem:[%s249 + $0x40] sm:$0xff] %v432
      %455 = vst [vmem:[%s249 + $0x50] sm:$0xff] %v437
      %456 = vst [vmem:[%s249 + $0x60] sm:$0xff] %v442
      %457 = vst [vmem:[%s249 + $0x70] sm:$0xf] %v447
      %v458 = vxor.u32 %v412, 2147483648
      %v459 = vxor.u32 %v417, 2147483648
      %v460 = vxor.u32 %v422, 2147483648
      %v461 = vxor.u32 %v427, 2147483648
      %v462 = vxor.u32 %v432, 2147483648
      %v463 = vxor.u32 %v437, 2147483648
      %v464 = vxor.u32 %v442, 2147483648
      %v465 = vxor.u32 %v447, 2147483648
      %v466 = vmul.f32 %v458, 1.442695
      %v467 = vpow.pop %v466
      %v468 = vmul.f32 %v459, 1.442695
      %v469 = vpow.pop %v468
      %v470 = vmul.f32 %v460, 1.442695
      %v471 = vpow.pop %v470
      %v472 = vmul.f32 %v461, 1.442695
      %v473 = vpow.pop %v472
      %v474 = vmul.f32 %v462, 1.442695
      %v475 = vpow.pop %v474
      %v476 = vmul.f32 %v463, 1.442695
      %v477 = vpow.pop %v476
      %v478 = vmul.f32 %v464, 1.442695
      %v479 = vpow.pop %v478
      %v480 = vmul.f32 %v465, 1.442695
      %v481 = vpow.pop %v480
      %v482 = vadd.f32 %v467, 1.0
      %v483 = vadd.f32 %v469, 1.0
      %v484 = vadd.f32 %v471, 1.0
      %v485 = vadd.f32 %v473, 1.0
      %v486 = vadd.f32 %v475, 1.0
      %v487 = vadd.f32 %v477, 1.0
      %v488 = vadd.f32 %v479, 1.0
      %v489 = vadd.f32 %v481, 1.0
      %v490 = vrcp.pop %v482
      %v491 = vmul.f32 1.0, %v490
      %v492 = vrcp.pop %v483
      %v493 = vmul.f32 1.0, %v492
      %v494 = vrcp.pop %v484
      %v495 = vmul.f32 1.0, %v494
      %v496 = vrcp.pop %v485
      %v497 = vmul.f32 1.0, %v496
      %v498 = vrcp.pop %v486
      %v499 = vmul.f32 1.0, %v498
      %v500 = vrcp.pop %v487
      %v501 = vmul.f32 1.0, %v500
      %v502 = vrcp.pop %v488
      %v503 = vmul.f32 1.0, %v502
      %v504 = vrcp.pop %v489
      %v505 = vmul.f32 1.0, %v504
      %s506 = sadd.s32 %s261, 0
      %v507 = vlaneseq
      %v508 = vand.u32 %v507, 127
      %v509 = vstv %s506
      %v510 = vadd.s32 %v509, %v508
      %v511 = vcvt.s32.f32 %v510
      %v512 = vadd.f32 %v511, 0.5
      %v513 = vmul.f32 %v512, 0.0625
      %v514 = vfloor.f32 %v513
      %v515 = vmul.f32 %v514, 16.0
      %v516 = vsub.f32 %v511, %v515
      %v517 = vsub.f32 %v516, 0.5
      %518 = vset.pattern.permute.xlu0 3
      %519 = vperm.xlu0 %518, %v262
      %v520 = vpop.permute.xlu0 %519
      %522 = vset.pattern.permute.xlu0 3
      %523 = vperm.xlu0 %522, %v263
      %v524 = vpop.permute.xlu0 %523
      %526 = vset.pattern.permute.xlu0 3
      %527 = vperm.xlu0 %526, %v264
      %v528 = vpop.permute.xlu0 %527
      %530 = vset.pattern.permute.xlu0 3
      %531 = vperm.xlu0 %530, %v265
      %v532 = vpop.permute.xlu0 %531
      %534 = vset.pattern.permute.xlu0 3
      %535 = vperm.xlu0 %534, %v266
      %v536 = vpop.permute.xlu0 %535
      %538 = vset.pattern.permute.xlu0 3
      %539 = vperm.xlu0 %538, %v267
      %v540 = vpop.permute.xlu0 %539
      %542 = vset.pattern.permute.xlu0 3
      %543 = vperm.xlu0 %542, %v268
      %v544 = vpop.permute.xlu0 %543
      %546 = vset.pattern.permute.xlu0 3
      %547 = vperm.xlu0 %546, %v269
      %v548 = vpop.permute.xlu0 %547
      %v550 = vmul.f32 %v520, %v517
      %v551 = vmul.f32 %v524, %v517
      %v552 = vmul.f32 %v528, %v517
      %v553 = vmul.f32 %v532, %v517
      %v554 = vmul.f32 %v536, %v517
      %v555 = vmul.f32 %v540, %v517
      %v556 = vmul.f32 %v544, %v517
      %v557 = vmul.f32 %v548, %v517
      %v558 = vsub.f32 %v514, 0.5
      %559 = vset.pattern.permute.xlu0 4
      %560 = vperm.xlu0 %559, %v262
      %v561 = vpop.permute.xlu0 %560
      %563 = vset.pattern.permute.xlu0 4
      %564 = vperm.xlu0 %563, %v263
      %v565 = vpop.permute.xlu0 %564
      %567 = vset.pattern.permute.xlu0 4
      %568 = vperm.xlu0 %567, %v264
      %v569 = vpop.permute.xlu0 %568
      %571 = vset.pattern.permute.xlu0 4
      %572 = vperm.xlu0 %571, %v265
      %v573 = vpop.permute.xlu0 %572
      %575 = vset.pattern.permute.xlu0 4
      %576 = vperm.xlu0 %575, %v266
      %v577 = vpop.permute.xlu0 %576
      %579 = vset.pattern.permute.xlu0 4
      %580 = vperm.xlu0 %579, %v267
      %v581 = vpop.permute.xlu0 %580
      %583 = vset.pattern.permute.xlu0 4
      %584 = vperm.xlu0 %583, %v268
      %v585 = vpop.permute.xlu0 %584
      %587 = vset.pattern.permute.xlu0 4
      %588 = vperm.xlu0 %587, %v269
      %v589 = vpop.permute.xlu0 %588
      %v591 = vmul.f32 %v561, %v558
      %v592 = vmul.f32 %v565, %v558
      %v593 = vmul.f32 %v569, %v558
      %v594 = vmul.f32 %v573, %v558
      %v595 = vmul.f32 %v577, %v558
      %v596 = vmul.f32 %v581, %v558
      %v597 = vmul.f32 %v585, %v558
      %v598 = vmul.f32 %v589, %v558
      %v599 = vadd.f32 %v550, %v591
      %v600 = vadd.f32 %v551, %v592
      %v601 = vadd.f32 %v552, %v593
      %v602 = vadd.f32 %v553, %v594
      %v603 = vadd.f32 %v554, %v595
      %v604 = vadd.f32 %v555, %v596
      %v605 = vadd.f32 %v556, %v597
      %v606 = vadd.f32 %v557, %v598
      %607 = vset.pattern.permute.xlu0 1
      %608 = vperm.xlu0 %607, %v262
      %v609 = vpop.permute.xlu0 %608
      %611 = vset.pattern.permute.xlu0 1
      %612 = vperm.xlu0 %611, %v263
      %v613 = vpop.permute.xlu0 %612
      %615 = vset.pattern.permute.xlu0 1
      %616 = vperm.xlu0 %615, %v264
      %v617 = vpop.permute.xlu0 %616
      %619 = vset.pattern.permute.xlu0 1
      %620 = vperm.xlu0 %619, %v265
      %v621 = vpop.permute.xlu0 %620
      %623 = vset.pattern.permute.xlu0 1
      %624 = vperm.xlu0 %623, %v266
      %v625 = vpop.permute.xlu0 %624
      %627 = vset.pattern.permute.xlu0 1
      %628 = vperm.xlu0 %627, %v267
      %v629 = vpop.permute.xlu0 %628
      %631 = vset.pattern.permute.xlu0 1
      %632 = vperm.xlu0 %631, %v268
      %v633 = vpop.permute.xlu0 %632
      %635 = vset.pattern.permute.xlu0 1
      %636 = vperm.xlu0 %635, %v269
      %v637 = vpop.permute.xlu0 %636
      %v639 = vmul.f32 %v609, %v491
      %v640 = vmul.f32 %v613, %v493
      %v641 = vmul.f32 %v617, %v495
      %v642 = vmul.f32 %v621, %v497
      %v643 = vmul.f32 %v625, %v499
      %v644 = vmul.f32 %v629, %v501
      %v645 = vmul.f32 %v633, %v503
      %v646 = vmul.f32 %v637, %v505
      %647 = vset.pattern.permute.xlu0 2
      %648 = vperm.xlu0 %647, %v262
      %v649 = vpop.permute.xlu0 %648
      %651 = vset.pattern.permute.xlu0 2
      %652 = vperm.xlu0 %651, %v263
      %v653 = vpop.permute.xlu0 %652
      %655 = vset.pattern.permute.xlu0 2
      %656 = vperm.xlu0 %655, %v264
      %v657 = vpop.permute.xlu0 %656
      %659 = vset.pattern.permute.xlu0 2
      %660 = vperm.xlu0 %659, %v265
      %v661 = vpop.permute.xlu0 %660
      %663 = vset.pattern.permute.xlu0 2
      %664 = vperm.xlu0 %663, %v266
      %v665 = vpop.permute.xlu0 %664
      %667 = vset.pattern.permute.xlu0 2
      %668 = vperm.xlu0 %667, %v267
      %v669 = vpop.permute.xlu0 %668
      %671 = vset.pattern.permute.xlu0 2
      %672 = vperm.xlu0 %671, %v268
      %v673 = vpop.permute.xlu0 %672
      %675 = vset.pattern.permute.xlu0 2
      %676 = vperm.xlu0 %675, %v269
      %v677 = vpop.permute.xlu0 %676
      %v679 = vadd.f32 %v639, %v649
      %v680 = vadd.f32 %v640, %v653
      %v681 = vadd.f32 %v641, %v657
      %v682 = vadd.f32 %v642, %v661
      %v683 = vadd.f32 %v643, %v665
      %v684 = vadd.f32 %v644, %v669
      %v685 = vadd.f32 %v645, %v673
      %v686 = vadd.f32 %v646, %v677
      %v687 = vmul.f32 %v679, %v491
      %v688 = vmul.f32 %v680, %v493
      %v689 = vmul.f32 %v681, %v495
      %v690 = vmul.f32 %v682, %v497
      %v691 = vmul.f32 %v683, %v499
      %v692 = vmul.f32 %v684, %v501
      %v693 = vmul.f32 %v685, %v503
      %v694 = vmul.f32 %v686, %v505
      %v695 = vadd.f32 %v687, %v599
      %v696 = vadd.f32 %v688, %v600
      %v697 = vadd.f32 %v689, %v601
      %v698 = vadd.f32 %v690, %v602
      %v699 = vadd.f32 %v691, %v603
      %v700 = vadd.f32 %v692, %v604
      %v701 = vadd.f32 %v693, %v605
      %v702 = vadd.f32 %v694, %v606
      %703 = vst [vmem:[%s259] sm:$0xff] %v695
      %704 = vst [vmem:[%s259 + $0x10] sm:$0xff] %v696
      %705 = vst [vmem:[%s259 + $0x20] sm:$0xff] %v697
      %706 = vst [vmem:[%s259 + $0x30] sm:$0xff] %v698
      %707 = vst [vmem:[%s259 + $0x40] sm:$0xff] %v699
      %708 = vst [vmem:[%s259 + $0x50] sm:$0xff] %v700
      %709 = vst [vmem:[%s259 + $0x60] sm:$0xff] %v701
      %710 = vst [vmem:[%s259 + $0x70] sm:$0xf] %v702
      %v711 = vld [vmem:[%s2] sm:$0xff]
      %v712 = vld [vmem:[%s2 + $0x8] sm:$0xff]
      %v713 = vld [vmem:[%s2 + $0x10] sm:$0xff]
      %v714 = vld [vmem:[%s2 + $0x18] sm:$0xff]
      %v715 = vld [vmem:[%s2 + $0x20] sm:$0xff]
      %v716 = vld [vmem:[%s2 + $0x28] sm:$0xff]
      %v717 = vld [vmem:[%s2 + $0x30] sm:$0xff]
      %v718 = vld [vmem:[%s2 + $0x38] sm:$0xf]
      %s719 = scalar_lea.vmem %s239, 8
      %v720 = vld [vmem:[%s719] sm:$0xff]
      %v721 = vld [vmem:[%s719 + $0x10] sm:$0xff]
      %v722 = vld [vmem:[%s1] sm:$0xff]
      %v723 = vld [vmem:[%s1 + $0x8] sm:$0xff]
      %v724 = vld [vmem:[%s1 + $0x10] sm:$0xff]
      %v725 = vld [vmem:[%s1 + $0x18] sm:$0xff]
      %v726 = vld [vmem:[%s1 + $0x20] sm:$0xff]
      %v727 = vld [vmem:[%s1 + $0x28] sm:$0xff]
      %v728 = vld [vmem:[%s1 + $0x30] sm:$0xff]
      %v729 = vld [vmem:[%s1 + $0x38] sm:$0xf]
      %731 = vset.pattern.permute.xlu0 0
      %732 = vperm.xlu0 %731, %v711
      %v733 = vpop.permute.xlu0 %732
      %736 = vset.pattern.permute.xlu0 0
      %737 = vperm.xlu0 %736, %v712
      %v738 = vpop.permute.xlu0 %737
      %741 = vset.pattern.permute.xlu0 0
      %742 = vperm.xlu0 %741, %v713
      %v743 = vpop.permute.xlu0 %742
      %746 = vset.pattern.permute.xlu0 0
      %747 = vperm.xlu0 %746, %v714
      %v748 = vpop.permute.xlu0 %747
      %751 = vset.pattern.permute.xlu0 0
      %752 = vperm.xlu0 %751, %v715
      %v753 = vpop.permute.xlu0 %752
      %756 = vset.pattern.permute.xlu0 0
      %757 = vperm.xlu0 %756, %v716
      %v758 = vpop.permute.xlu0 %757
      %761 = vset.pattern.permute.xlu0 0
      %762 = vperm.xlu0 %761, %v717
      %v763 = vpop.permute.xlu0 %762
      %766 = vset.pattern.permute.xlu0 0
      %767 = vperm.xlu0 %766, %v718
      %v768 = vpop.permute.xlu0 %767
      %v771 = vsel %vm320, %v722, 0
      %v774 = vsel %vm320, %v723, 0
      %v777 = vsel %vm320, %v724, 0
      %v780 = vsel %vm320, %v725, 0
      %v783 = vsel %vm320, %v726, 0
      %v786 = vsel %vm320, %v727, 0
      %v789 = vsel %vm320, %v728, 0
      %v792 = vsel %vm320, %v729, 0
      %794 = vmatprep.subr.mxu0 0.0
      %795 = vmatpush1.msra.mxu0 %v720
      %796 = vmatprep.subr.mxu0 0.0
      %797 = vmatpush1.msra.mxu0 %v721
      %798 = vmatprep.subr.mxu0 0.0
      %799 = vmatpush1.msra.mxu0 0.0
      %800 = vmatprep.subr.mxu0 0.0
      %801 = vmatpush1.msra.mxu0 0.0
      %802 = vmatprep.subr.mxu0 0.0
      %803 = vmatpush1.msra.mxu0 0.0
      %804 = vmatprep.subr.mxu0 0.0
      %805 = vmatpush1.msra.mxu0 0.0
      %806 = vmatprep.subr.mxu0 0.0
      %807 = vmatpush1.msra.mxu0 0.0
      %808 = vmatprep.subr.mxu0 0.0
      %809 = vmatpush1.msra.mxu0 0.0
      %810 = vmatprep.subr.mxu0 0.0
      %811 = vmatpush1.msra.mxu0 0.0
      %812 = vmatprep.subr.mxu0 0.0
      %813 = vmatpush1.msra.mxu0 0.0
      %814 = vmatprep.subr.mxu0 0.0
      %815 = vmatpush1.msra.mxu0 0.0
      %816 = vmatprep.subr.mxu0 0.0
      %817 = vmatpush1.msra.mxu0 0.0
      %818 = vmatprep.subr.mxu0 0.0
      %819 = vmatpush1.msra.mxu0 0.0
      %820 = vmatprep.subr.mxu0 0.0
      %821 = vmatpush1.msra.mxu0 0.0
      %822 = vmatprep.subr.mxu0 0.0
      %823 = vmatpush1.msra.mxu0 0.0
      %824 = vmatprep.subr.mxu0 0.0
      %825 = vmatpush1.msra.mxu0 0.0
      %826 = vmatprep.subr.mxu0 0.0
      %827 = vmatpush1.msra.mxu0 0.0
      %828 = vmatprep.subr.mxu0 0.0
      %829 = vmatpush1.msra.mxu0 0.0
      %830 = vmatprep.subr.mxu0 0.0
      %831 = vmatpush1.msra.mxu0 0.0
      %832 = vmatprep.subr.mxu0 0.0
      %833 = vmatpush1.msra.mxu0 0.0
      %834 = vmatprep.subr.mxu0 0.0
      %835 = vmatpush1.msra.mxu0 0.0
      %836 = vmatprep.subr.mxu0 0.0
      %837 = vmatpush1.msra.mxu0 0.0
      %838 = vmatprep.subr.mxu0 0.0
      %839 = vmatpush1.msra.mxu0 0.0
      %840 = vmatprep.subr.mxu0 0.0
      %841 = vmatpush1.msra.mxu0 0.0
      %842 = vmatprep.subr.mxu0 0.0
      %843 = vmatpush1.msra.mxu0 0.0
      %844 = vmatprep.subr.mxu0 0.0
      %845 = vmatpush1.msra.mxu0 0.0
      %846 = vmatprep.subr.mxu0 0.0
      %847 = vmatpush1.msra.mxu0 0.0
      %848 = vmatprep.subr.mxu0 0.0
      %849 = vmatpush1.msra.mxu0 0.0
      %850 = vmatprep.subr.mxu0 0.0
      %851 = vmatpush1.msra.mxu0 0.0
      %852 = vmatprep.subr.mxu0 0.0
      %853 = vmatpush1.msra.mxu0 0.0
      %854 = vmatprep.subr.mxu0 0.0
      %855 = vmatpush1.msra.mxu0 0.0
      %856 = vmatprep.subr.mxu0 0.0
      %857 = vmatpush1.msra.mxu0 0.0
      %858 = vmatprep.mubr.f32.mxu0 0.0
      %859 = vmatmul.mubr.f32.gmra.mrb[0].mxu0 %v771
      %v860 = vpop.f32.mrb[0].mxu0
      %v861 = vadd.f32 %v733, %v860
      %v862 = vpop.f32.mrb[0].mxu0
      %863 = vmatprep.mubr.f32.mxu0 0.0
      %864 = vmatmul.mubr.f32.gmra.mrb[0].mxu0 %v774
      %v865 = vpop.f32.mrb[0].mxu0
      %v866 = vadd.f32 %v738, %v865
      %v867 = vpop.f32.mrb[0].mxu0
      %868 = vmatprep.mubr.f32.mxu0 0.0
      %869 = vmatmul.mubr.f32.gmra.mrb[0].mxu0 %v777
      %v870 = vpop.f32.mrb[0].mxu0
      %v871 = vadd.f32 %v743, %v870
      %v872 = vpop.f32.mrb[0].mxu0
      %873 = vmatprep.mubr.f32.mxu0 0.0
      %874 = vmatmul.mubr.f32.gmra.mrb[0].mxu0 %v780
      %v875 = vpop.f32.mrb[0].mxu0
      %v876 = vadd.f32 %v748, %v875
      %v877 = vpop.f32.mrb[0].mxu0
      %878 = vmatprep.mubr.f32.mxu0 0.0
      %879 = vmatmul.mubr.f32.gmra.mrb[0].mxu0 %v783
      %v880 = vpop.f32.mrb[0].mxu0
      %v881 = vadd.f32 %v753, %v880
      %v882 = vpop.f32.mrb[0].mxu0
      %883 = vmatprep.mubr.f32.mxu0 0.0
      %884 = vmatmul.mubr.f32.gmra.mrb[0].mxu0 %v786
      %v885 = vpop.f32.mrb[0].mxu0
      %v886 = vadd.f32 %v758, %v885
      %v887 = vpop.f32.mrb[0].mxu0
      %888 = vmatprep.mubr.f32.mxu0 0.0
      %889 = vmatmul.mubr.f32.gmra.mrb[0].mxu0 %v789
      %v890 = vpop.f32.mrb[0].mxu0
      %v891 = vadd.f32 %v763, %v890
      %v892 = vpop.f32.mrb[0].mxu0
      %893 = vmatprep.mubr.f32.mxu0 0.0
      %894 = vmatmul.mubr.f32.gmra.mrb[0].mxu0 %v792
      %v895 = vpop.f32.mrb[0].mxu0
      %v896 = vadd.f32 %v768, %v895
      %v897 = vpop.f32.mrb[0].mxu0
      %898 = vdwg.mxu0
      %s899 = scalar_lea.vmem %s249, 8
      %900 = vst [vmem:[%s899] sm:$0xff] %v861
      %901 = vst [vmem:[%s899 + $0x10] sm:$0xff] %v866
      %902 = vst [vmem:[%s899 + $0x20] sm:$0xff] %v871
      %903 = vst [vmem:[%s899 + $0x30] sm:$0xff] %v876
      %904 = vst [vmem:[%s899 + $0x40] sm:$0xff] %v881
      %905 = vst [vmem:[%s899 + $0x50] sm:$0xff] %v886
      %906 = vst [vmem:[%s899 + $0x60] sm:$0xff] %v891
      %907 = vst [vmem:[%s899 + $0x70] sm:$0xf] %v896
      %v908 = vxor.u32 %v861, 2147483648
      %v909 = vxor.u32 %v866, 2147483648
      %v910 = vxor.u32 %v871, 2147483648
      %v911 = vxor.u32 %v876, 2147483648
      %v912 = vxor.u32 %v881, 2147483648
      %v913 = vxor.u32 %v886, 2147483648
      %v914 = vxor.u32 %v891, 2147483648
      %v915 = vxor.u32 %v896, 2147483648
      %v916 = vmul.f32 %v908, 1.442695
      %v917 = vpow.pop %v916
      %v918 = vmul.f32 %v909, 1.442695
      %v919 = vpow.pop %v918
      %v920 = vmul.f32 %v910, 1.442695
      %v921 = vpow.pop %v920
      %v922 = vmul.f32 %v911, 1.442695
      %v923 = vpow.pop %v922
      %v924 = vmul.f32 %v912, 1.442695
      %v925 = vpow.pop %v924
      %v926 = vmul.f32 %v913, 1.442695
      %v927 = vpow.pop %v926
      %v928 = vmul.f32 %v914, 1.442695
      %v929 = vpow.pop %v928
      %v930 = vmul.f32 %v915, 1.442695
      %v931 = vpow.pop %v930
      %v932 = vadd.f32 %v917, 1.0
      %v933 = vadd.f32 %v919, 1.0
      %v934 = vadd.f32 %v921, 1.0
      %v935 = vadd.f32 %v923, 1.0
      %v936 = vadd.f32 %v925, 1.0
      %v937 = vadd.f32 %v927, 1.0
      %v938 = vadd.f32 %v929, 1.0
      %v939 = vadd.f32 %v931, 1.0
      %v940 = vrcp.pop %v932
      %v941 = vmul.f32 1.0, %v940
      %v942 = vrcp.pop %v933
      %v943 = vmul.f32 1.0, %v942
      %v944 = vrcp.pop %v934
      %v945 = vmul.f32 1.0, %v944
      %v946 = vrcp.pop %v935
      %v947 = vmul.f32 1.0, %v946
      %v948 = vrcp.pop %v936
      %v949 = vmul.f32 1.0, %v948
      %v950 = vrcp.pop %v937
      %v951 = vmul.f32 1.0, %v950
      %v952 = vrcp.pop %v938
      %v953 = vmul.f32 1.0, %v952
      %v954 = vrcp.pop %v939
      %v955 = vmul.f32 1.0, %v954
      %s956 = sadd.s32 %s261, 128
      %v957 = vstv %s956
      %v958 = vadd.s32 %v957, %v508
      %v959 = vcvt.s32.f32 %v958
      %v960 = vadd.f32 %v959, 0.5
      %v961 = vmul.f32 %v960, 0.0625
      %v962 = vfloor.f32 %v961
      %v963 = vmul.f32 %v962, 16.0
      %v964 = vsub.f32 %v959, %v963
      %v965 = vsub.f32 %v964, 0.5
      %966 = vset.pattern.permute.xlu0 3
      %967 = vperm.xlu0 %966, %v711
      %v968 = vpop.permute.xlu0 %967
      %970 = vset.pattern.permute.xlu0 3
      %971 = vperm.xlu0 %970, %v712
      %v972 = vpop.permute.xlu0 %971
      %974 = vset.pattern.permute.xlu0 3
      %975 = vperm.xlu0 %974, %v713
      %v976 = vpop.permute.xlu0 %975
      %978 = vset.pattern.permute.xlu0 3
      %979 = vperm.xlu0 %978, %v714
      %v980 = vpop.permute.xlu0 %979
      %982 = vset.pattern.permute.xlu0 3
      %983 = vperm.xlu0 %982, %v715
      %v984 = vpop.permute.xlu0 %983
      %986 = vset.pattern.permute.xlu0 3
      %987 = vperm.xlu0 %986, %v716
      %v988 = vpop.permute.xlu0 %987
      %990 = vset.pattern.permute.xlu0 3
      %991 = vperm.xlu0 %990, %v717
      %v992 = vpop.permute.xlu0 %991
      %994 = vset.pattern.permute.xlu0 3
      %995 = vperm.xlu0 %994, %v718
      %v996 = vpop.permute.xlu0 %995
      %v998 = vmul.f32 %v968, %v965
      %v999 = vmul.f32 %v972, %v965
      %v1000 = vmul.f32 %v976, %v965
      %v1001 = vmul.f32 %v980, %v965
      %v1002 = vmul.f32 %v984, %v965
      %v1003 = vmul.f32 %v988, %v965
      %v1004 = vmul.f32 %v992, %v965
      %v1005 = vmul.f32 %v996, %v965
      %v1006 = vsub.f32 %v962, 0.5
      %1007 = vset.pattern.permute.xlu0 4
      %1008 = vperm.xlu0 %1007, %v711
      %v1009 = vpop.permute.xlu0 %1008
      %1011 = vset.pattern.permute.xlu0 4
      %1012 = vperm.xlu0 %1011, %v712
      %v1013 = vpop.permute.xlu0 %1012
      %1015 = vset.pattern.permute.xlu0 4
      %1016 = vperm.xlu0 %1015, %v713
      %v1017 = vpop.permute.xlu0 %1016
      %1019 = vset.pattern.permute.xlu0 4
      %1020 = vperm.xlu0 %1019, %v714
      %v1021 = vpop.permute.xlu0 %1020
      %1023 = vset.pattern.permute.xlu0 4
      %1024 = vperm.xlu0 %1023, %v715
      %v1025 = vpop.permute.xlu0 %1024
      %1027 = vset.pattern.permute.xlu0 4
      %1028 = vperm.xlu0 %1027, %v716
      %v1029 = vpop.permute.xlu0 %1028
      %1031 = vset.pattern.permute.xlu0 4
      %1032 = vperm.xlu0 %1031, %v717
      %v1033 = vpop.permute.xlu0 %1032
      %1035 = vset.pattern.permute.xlu0 4
      %1036 = vperm.xlu0 %1035, %v718
      %v1037 = vpop.permute.xlu0 %1036
      %v1039 = vmul.f32 %v1009, %v1006
      %v1040 = vmul.f32 %v1013, %v1006
      %v1041 = vmul.f32 %v1017, %v1006
      %v1042 = vmul.f32 %v1021, %v1006
      %v1043 = vmul.f32 %v1025, %v1006
      %v1044 = vmul.f32 %v1029, %v1006
      %v1045 = vmul.f32 %v1033, %v1006
      %v1046 = vmul.f32 %v1037, %v1006
      %v1047 = vadd.f32 %v998, %v1039
      %v1048 = vadd.f32 %v999, %v1040
      %v1049 = vadd.f32 %v1000, %v1041
      %v1050 = vadd.f32 %v1001, %v1042
      %v1051 = vadd.f32 %v1002, %v1043
      %v1052 = vadd.f32 %v1003, %v1044
      %v1053 = vadd.f32 %v1004, %v1045
      %v1054 = vadd.f32 %v1005, %v1046
      %1055 = vset.pattern.permute.xlu0 1
      %1056 = vperm.xlu0 %1055, %v711
      %v1057 = vpop.permute.xlu0 %1056
      %1059 = vset.pattern.permute.xlu0 1
      %1060 = vperm.xlu0 %1059, %v712
      %v1061 = vpop.permute.xlu0 %1060
      %1063 = vset.pattern.permute.xlu0 1
      %1064 = vperm.xlu0 %1063, %v713
      %v1065 = vpop.permute.xlu0 %1064
      %1067 = vset.pattern.permute.xlu0 1
      %1068 = vperm.xlu0 %1067, %v714
      %v1069 = vpop.permute.xlu0 %1068
      %1071 = vset.pattern.permute.xlu0 1
      %1072 = vperm.xlu0 %1071, %v715
      %v1073 = vpop.permute.xlu0 %1072
      %1075 = vset.pattern.permute.xlu0 1
      %1076 = vperm.xlu0 %1075, %v716
      %v1077 = vpop.permute.xlu0 %1076
      %1079 = vset.pattern.permute.xlu0 1
      %1080 = vperm.xlu0 %1079, %v717
      %v1081 = vpop.permute.xlu0 %1080
      %1083 = vset.pattern.permute.xlu0 1
      %1084 = vperm.xlu0 %1083, %v718
      %v1085 = vpop.permute.xlu0 %1084
      %v1087 = vmul.f32 %v1057, %v941
      %v1088 = vmul.f32 %v1061, %v943
      %v1089 = vmul.f32 %v1065, %v945
      %v1090 = vmul.f32 %v1069, %v947
      %v1091 = vmul.f32 %v1073, %v949
      %v1092 = vmul.f32 %v1077, %v951
      %v1093 = vmul.f32 %v1081, %v953
      %v1094 = vmul.f32 %v1085, %v955
      %1095 = vset.pattern.permute.xlu0 2
      %1096 = vperm.xlu0 %1095, %v711
      %v1097 = vpop.permute.xlu0 %1096
      %1099 = vset.pattern.permute.xlu0 2
      %1100 = vperm.xlu0 %1099, %v712
      %v1101 = vpop.permute.xlu0 %1100
      %1103 = vset.pattern.permute.xlu0 2
      %1104 = vperm.xlu0 %1103, %v713
      %v1105 = vpop.permute.xlu0 %1104
      %1107 = vset.pattern.permute.xlu0 2
      %1108 = vperm.xlu0 %1107, %v714
      %v1109 = vpop.permute.xlu0 %1108
      %1111 = vset.pattern.permute.xlu0 2
      %1112 = vperm.xlu0 %1111, %v715
      %v1113 = vpop.permute.xlu0 %1112
      %1115 = vset.pattern.permute.xlu0 2
      %1116 = vperm.xlu0 %1115, %v716
      %v1117 = vpop.permute.xlu0 %1116
      %1119 = vset.pattern.permute.xlu0 2
      %1120 = vperm.xlu0 %1119, %v717
      %v1121 = vpop.permute.xlu0 %1120
      %1123 = vset.pattern.permute.xlu0 2
      %1124 = vperm.xlu0 %1123, %v718
      %v1125 = vpop.permute.xlu0 %1124
      %v1127 = vadd.f32 %v1087, %v1097
      %v1128 = vadd.f32 %v1088, %v1101
      %v1129 = vadd.f32 %v1089, %v1105
      %v1130 = vadd.f32 %v1090, %v1109
      %v1131 = vadd.f32 %v1091, %v1113
      %v1132 = vadd.f32 %v1092, %v1117
      %v1133 = vadd.f32 %v1093, %v1121
      %v1134 = vadd.f32 %v1094, %v1125
      %v1135 = vmul.f32 %v1127, %v941
      %v1136 = vmul.f32 %v1128, %v943
      %v1137 = vmul.f32 %v1129, %v945
      %v1138 = vmul.f32 %v1130, %v947
      %v1139 = vmul.f32 %v1131, %v949
      %v1140 = vmul.f32 %v1132, %v951
      %v1141 = vmul.f32 %v1133, %v953
      %v1142 = vmul.f32 %v1134, %v955
      %v1143 = vadd.f32 %v1135, %v1047
      %v1144 = vadd.f32 %v1136, %v1048
      %v1145 = vadd.f32 %v1137, %v1049
      %v1146 = vadd.f32 %v1138, %v1050
      %v1147 = vadd.f32 %v1139, %v1051
      %v1148 = vadd.f32 %v1140, %v1052
      %v1149 = vadd.f32 %v1141, %v1053
      %v1150 = vadd.f32 %v1142, %v1054
      %s1151 = scalar_lea.vmem %s259, 8
      %1152 = vst [vmem:[%s1151] sm:$0xff] %v1143
      %1153 = vst [vmem:[%s1151 + $0x10] sm:$0xff] %v1144
      %1154 = vst [vmem:[%s1151 + $0x20] sm:$0xff] %v1145
      %1155 = vst [vmem:[%s1151 + $0x30] sm:$0xff] %v1146
      %1156 = vst [vmem:[%s1151 + $0x40] sm:$0xff] %v1147
      %1157 = vst [vmem:[%s1151 + $0x50] sm:$0xff] %v1148
      %1158 = vst [vmem:[%s1151 + $0x60] sm:$0xff] %v1149
      %1159 = vst [vmem:[%s1151 + $0x70] sm:$0xf] %v1150
      %s1160 = smul.u32 2, %s21
      %p1161 = scmp.lt.s32.totalorder %s20, 1
      %s1162 = scalar_select %p1161, %s20, 1
      %p1163 = scmp.lt.s32.totalorder %s1160, 1
      %s1164 = scalar_select %p1163, %s1160, 1
      %s1165 = smul.addr %s1162, 16
      %s1166 = sadd.s32 %s1164, %s1165
      %s1167 = smul.addr %s1166, 8
      %s1168 = scalar_lea.vmem %s3, %s1167
      %s1169 = smul.u32 2, %s21
      %p1170 = scmp.lt.s32.totalorder %s20, 1
      %s1171 = scalar_select %p1170, %s20, 1
      %p1172 = scmp.lt.s32.totalorder %s1169, 1
      %s1173 = scalar_select %p1172, %s1169, 1
      %s1174 = smul.addr %s1171, 16
      %s1175 = sadd.s32 %s1173, %s1174
      %s1176 = smul.addr %s1175, 8
      %s1177 = scalar_lea.vmem %s4, %s1176
      // Predicated region
      $region33: #{tpu_custom_call.1} parent=31 // pred_check
        %p1178 = pneg %p118
      $region34: #{tpu_custom_call.1} parent=31 // pred_check_branch
        %1180 = sbr.rel (%p1178) target = $region36
      $region35: #{tpu_custom_call.1} parent=31 // pred_region
        %s1181 = smul.u32 2, %s21
      $region36: #{tpu_custom_call.1} parent=31 // pred_fallthru
        _
      // Predicated region
      $region37: #{tpu_custom_call.1} parent=31 // pred_check
        %p1182 = pneg %p146
      $region38: #{tpu_custom_call.1} parent=31 // pred_check_branch
        %1184 = sbr.rel (%p1182) target = $region40
      $region39: #{tpu_custom_call.1} parent=31 // pred_region
        %s1185 = smul.u32 2, %s21
      $region40: #{tpu_custom_call.1} parent=31 // pred_fallthru
        _
    $region32: #{tpu_custom_call.1} parent=5 // pred_fallthru
      _
    %p1186 = scmp.le.s32.totalorder 2, %s11
    // Predicated region
    $region41: #{tpu_custom_call.1} parent=5 // pred_check
      %p1187 = pneg %p1186
    $region42: #{tpu_custom_call.1} parent=5 // pred_check_branch
      %1189 = sbr.rel (%p1187) target = $region44
    $region43: #{tpu_custom_call.1} parent=5 // pred_region
      %s1190 = ssub.s32 %s11, 2
      // Predicated region
      $region45: #{tpu_custom_call.1} parent=43 // pred_check
        %p1191 = pneg %p124
      $region46: #{tpu_custom_call.1} parent=43 // pred_check_branch
        %1193 = sbr.rel (%p1191) target = $region48
      $region47: #{tpu_custom_call.1} parent=43 // pred_region
        %s1194 = smul.u32 2, %s23
        %p1195 = scmp.lt.s32.totalorder %s22, 1
        %s1196 = scalar_select %p1195, %s22, 1
        %p1197 = scmp.lt.s32.totalorder %s1194, 1
        %s1198 = scalar_select %p1197, %s1194, 1
        %s1199 = smul.addr %s1196, 16
        %s1200 = sadd.s32 %s1198, %s1199
        %s1201 = smul.addr %s1200, 8
        %s1202 = scalar_lea.vmem %s3, %s1201
      $region48: #{tpu_custom_call.1} parent=43 // pred_fallthru
        _
      // Predicated region
      $region49: #{tpu_custom_call.1} parent=43 // pred_check
        %p1203 = pneg %p152
      $region50: #{tpu_custom_call.1} parent=43 // pred_check_branch
        %1205 = sbr.rel (%p1203) target = $region52
      $region51: #{tpu_custom_call.1} parent=43 // pred_region
        %s1206 = smul.u32 2, %s23
        %p1207 = scmp.lt.s32.totalorder %s22, 1
        %s1208 = scalar_select %p1207, %s22, 1
        %p1209 = scmp.lt.s32.totalorder %s1206, 1
        %s1210 = scalar_select %p1209, %s1206, 1
        %s1211 = smul.addr %s1208, 16
        %s1212 = sadd.s32 %s1210, %s1211
        %s1213 = smul.addr %s1212, 8
        %s1214 = scalar_lea.vmem %s4, %s1213
      $region52: #{tpu_custom_call.1} parent=43 // pred_fallthru
        _
    $region44: #{tpu_custom_call.1} parent=5 // pred_fallthru
      _
  $region6: #{tpu_custom_call.1} parent=0 // loop_footer
    %s15 = sadd.s32 1, %s11
  $region7: #{tpu_custom_call.1} parent=0 // loop_footer_branch
    %10 = sbr.rel target = $region3
  $region8: #{tpu_custom_call.1} parent=0 // loop_exit
    _

</llo_original>
